<compile_context>
chip_gen: v5e
topology: v5e:2x2
jax: 0.10.0
libtpu: 0.0.40
codegen_flags: <defaults>
</compile_context>

<pallas_src>
import functools

import jax
import jax.numpy as jnp
from jax.experimental import pallas as pl
from jax.experimental.pallas import tpu as pltpu

MIB = 1024 * 1024


def _round_up(x, m):
    return ((x + m - 1) // m) * m


def _cdiv(a, b):
    return -(-a // b)


def _tpu_vmem_capacity_bytes():
    """Physical per-core VMEM (128 MiB on v5e/v6e, 64 MiB on v7x).
    Falls back to the most conservative value if the query is unavailable."""
    try:
        return int(pltpu.get_tpu_info().vmem_capacity_bytes)
    except Exception:
        return 64 * MIB


def _choose_batch_tile(B, tb_max):
    """Batch tile TB: multiple of 8, <= tb_max, >= 2 grid steps once B >= 256
    (v7x dual-TensorCore sharding; harmless on single-core v5e/v6e)."""
    Bp8 = _round_up(max(B, 1), 8)
    if Bp8 <= 256:
        return Bp8                      # tiny batch: one tile, splitting is pure overhead
    n_tiles = max(2, _cdiv(Bp8, tb_max))
    return _round_up(_cdiv(Bp8, n_tiles), 8)


def _vmem_estimate_bytes(TB, K, Cp, single_buffer_weights):
    """Rough VMEM footprint: double-buffered x/out tiles, resident weights,
    f32 hidden intermediate (+ slack)."""
    wmult = 1 if single_buffer_weights else 2
    return (2 * TB * K * 4                       # x tile, f32, double-buffered
            + 2 * TB * Cp * 4                    # out tile, f32, double-buffered
            + wmult * (K * Cp + Cp * Cp) * 2     # bf16 weights (VMEM-resident)
            + wmult * 2 * Cp * 4                 # f32 biases (VMEM-resident)
            + 2 * TB * Cp * 4)                   # f32 hidden activation + slack


def test_net_kernel(x_ref, w1_ref, b1_ref, w2_ref, b2_ref, o_ref):
    # layer1: Linear(n_in -> n_classes) on the MXU. x is cast to bf16 right at
    # the MXU boundary (cheap VPU cast; avoids a wrapper-side pad/cast pass).
    h = jnp.dot(x_ref[...].astype(jnp.bfloat16), w1_ref[...],
                preferred_element_type=jnp.float32)
    # bias add + tanh in f32 (EUP tanh; v5e has no bf16 VPU/EUP path).
    h = jnp.tanh(h + b1_ref[...])
    # layer2: Linear(n_classes -> n_classes); bf16 at the dot, f32 accumulate.
    y = jnp.dot(h.astype(jnp.bfloat16), w2_ref[...],
                preferred_element_type=jnp.float32)
    o_ref[...] = (y + b2_ref[...]).astype(o_ref.dtype)
    # NOTE: for very wide layers (Cp >= ~512, compute-bound) a chunked
    # fori_loop over TB rows would overlap tanh (EUP/VPU) with MXU work of the
    # next chunk; at the HBM-bound sizes targeted here it is neutral.


def prepare_params(w1, b1, w2, b2):
    """One-time parameter prep (hoisted out of the per-call path).

    Pads the class dim to a lane-dense multiple of 128 and casts weights to
    bf16 so the kernel reads them directly, with no per-forward pad/cast pass.
    The contraction (n_in) dim stays unpadded: the kernel uses full-extent
    blocks along it, which is legal for any n_in.
    Zero padding is exact: padded w1 columns give tanh(0+0)=0 hidden values
    which hit all-zero w2 rows; padded output columns end up 0 and are sliced off.
    """
    n_in, n_classes = w1.shape
    Cp = _round_up(max(n_classes, 1), 128)
    w1p = jnp.zeros((n_in, Cp), jnp.bfloat16).at[:, :n_classes].set(
        w1.astype(jnp.bfloat16))
    b1p = jnp.zeros((1, Cp), jnp.float32).at[0, :n_classes].set(
        b1.reshape(-1).astype(jnp.float32))
    w2p = jnp.zeros((Cp, Cp), jnp.bfloat16).at[:n_classes, :n_classes].set(
        w2.astype(jnp.bfloat16))
    b2p = jnp.zeros((1, Cp), jnp.float32).at[0, :n_classes].set(
        b2.reshape(-1).astype(jnp.float32))
    return {"w1": w1p, "b1": b1p, "w2": w2p, "b2": b2p,
            "n_classes": int(n_classes)}


@functools.partial(jax.jit, static_argnames=("n_classes", "single_buffer_weights"))
def _forward(x, w1p, b1p, w2p, b2p, *, n_classes, single_buffer_weights):
    B, n_in = x.shape
    Cp = w1p.shape[1]

    # Generation-aware sizing: v5e/v6e (128 MiB VMEM) -> ~96 MiB scoped limit,
    # TB up to 1024; v7x (64 MiB) -> ~48 MiB limit, TB <= 512.
    vmem_cap = _tpu_vmem_capacity_bytes()
    vmem_limit = min(100 * MIB, (vmem_cap * 3) // 4)
    tb_max = 1024 if vmem_cap >= 96 * MIB else 512

    TB = _choose_batch_tile(B, tb_max)
    # Explicit VMEM-fit check (matters on v7x): shrink the batch tile until
    # pipeline buffers + resident weights fit comfortably under the limit.
    while TB > 8 and _vmem_estimate_bytes(TB, n_in, Cp, single_buffer_weights) > (vmem_limit * 4) // 5:
        TB = max(8, _round_up(TB // 2, 8))
    # TODO(synk): if n_in is so large that the resident w1 block alone exceeds
    # VMEM, add a K grid axis marked "arbitrary" with an f32 accumulator
    # (pl.when init/finalize) instead of shrinking TB further.

    Bp = _round_up(max(B, 1), TB)        # pad waste bounded by < TB rows
    num_tiles = Bp // TB

    # Only the batch rows are padded (rarely needed; no dtype cast, no K pad).
    if Bp != B:
        xp = jnp.zeros((Bp, n_in), x.dtype).at[:B, :].set(x)
    else:
        xp = x

    # Single-buffer the VMEM-resident operands (their block never changes).
    resident = {"pipeline_mode": pl.Buffered(1)} if single_buffer_weights else {}

    out_padded = pl.pallas_call(
        test_net_kernel,
        out_shape=jax.ShapeDtypeStruct((Bp, Cp), jnp.float32),
        grid=(num_tiles,),
        in_specs=[
            pl.BlockSpec((TB, n_in), lambda i: (i, 0)),               # x: batch-tiled
            pl.BlockSpec((n_in, Cp), lambda i: (0, 0), **resident),   # w1: VMEM-resident
            pl.BlockSpec((1, Cp), lambda i: (0, 0), **resident),      # b1: VMEM-resident
            pl.BlockSpec((Cp, Cp), lambda i: (0, 0), **resident),     # w2: VMEM-resident
            pl.BlockSpec((1, Cp), lambda i: (0, 0), **resident),      # b2: VMEM-resident
        ],
        out_specs=pl.BlockSpec((TB, Cp), lambda i: (i, 0)),
        compiler_params=pltpu.CompilerParams(
            dimension_semantics=("parallel",),   # batch tiles independent (v7x 2-TC sharding)
            vmem_limit_bytes=int(vmem_limit),
        ),
    )(xp, w1p, b1p, w2p, b2p)

    return out_padded[:B, :n_classes]


_USE_SINGLE_BUFFER = None  # probed once; cached


def test_net_forward(x, params):
    """x: [B, n_in] (f32); params from prepare_params(). Returns [B, n_classes] f32."""
    global _USE_SINGLE_BUFFER
    args = (x, params["w1"], params["b1"], params["w2"], params["b2"])
    kw = dict(n_classes=params["n_classes"])
    if _USE_SINGLE_BUFFER is None:
        try:
            out = jax.block_until_ready(
                _forward(*args, single_buffer_weights=True, **kw))
            _USE_SINGLE_BUFFER = True
            return out
        except Exception:
            # Installed JAX/Mosaic rejected pl.Buffered(1); fall back to the
            # default double-buffered resident blocks.
            _USE_SINGLE_BUFFER = False
    return _forward(*args, single_buffer_weights=_USE_SINGLE_BUFFER, **kw)


def init_params(key, n_in, n_classes, dtype=jnp.float32):
    # Mimics nn.Linear's uniform(-1/sqrt(fan_in), 1/sqrt(fan_in)) init.
    k1, k2, k3, k4 = jax.random.split(key, 4)
    bound1 = 1.0 / jnp.sqrt(n_in)
    bound2 = 1.0 / jnp.sqrt(n_classes)
    # Stored as [in, out] (transpose of PyTorch's [out, in]) so the kernel does x @ W.
    w1 = jax.random.uniform(k1, (n_in, n_classes), dtype, -bound1, bound1)
    b1 = jax.random.uniform(k2, (n_classes,), dtype, -bound1, bound1)
    w2 = jax.random.uniform(k3, (n_classes, n_classes), dtype, -bound2, bound2)
    b2 = jax.random.uniform(k4, (n_classes,), dtype, -bound2, bound2)
    return w1, b1, w2, b2


if __name__ == "__main__":
    key = jax.random.PRNGKey(0)
    kx, kp = jax.random.split(key)

    batch, n_in, n_classes = 8, 32, 16
    x = jax.random.normal(kx, (batch, n_in), jnp.float32)
    w1, b1, w2, b2 = init_params(kp, n_in, n_classes)

    # One-time weight pad/cast, hoisted out of the per-forward path.
    params = prepare_params(w1, b1, w2, b2)

    out = test_net_forward(x, params)
    out = jax.block_until_ready(out)
    assert out.shape == (batch, n_classes)

    # Reference with the same bf16-at-the-dot / f32-accumulate recipe.
    xb, w1b, w2b = (t.astype(jnp.bfloat16) for t in (x, w1, w2))
    h_ref = jnp.tanh(
        jnp.dot(xb, w1b, preferred_element_type=jnp.float32) + b1[None, :])
    ref = jnp.dot(h_ref.astype(jnp.bfloat16), w2b,
                  preferred_element_type=jnp.float32) + b2[None, :]
    assert jnp.allclose(out, ref, atol=1e-3, rtol=1e-3)

    # Sanity check vs full-f32 math (loose tolerance: bf16 MXU inputs).
    ref_f32 = jnp.tanh(x @ w1 + b1[None, :]) @ w2 + b2[None, :]
    assert jnp.allclose(out, ref_f32, atol=5e-2, rtol=5e-2)

    print("KERNEL_OK")
</pallas_src>

<mosaic_0001>
module attributes {stable_mosaic.version = 11 : i64} {
  func.func @test_net_kernel(%arg0: i32, %arg1: memref<8x32xf32, #tpu.memory_space<vmem>>, %arg2: memref<32x128xbf16, #tpu.memory_space<vmem>>, %arg3: memref<1x128xf32, #tpu.memory_space<vmem>>, %arg4: memref<128x128xbf16, #tpu.memory_space<vmem>>, %arg5: memref<1x128xf32, #tpu.memory_space<vmem>>, %arg6: memref<8x128xf32, #tpu.memory_space<vmem>>) attributes {dimension_semantics = [#tpu.dimension_semantics<parallel>], iteration_bounds = array<i64: 1>, scalar_prefetch = 0 : i64, scratch_operands = 0 : i64, tpu.core_type = #tpu.core_type<tc>, window_params = [{transform_indices = @transform_0, window_bounds = array<i64: 8, 32>}, {pipeline_mode = #tpu.pipeline_mode<synchronous>, transform_indices = @transform_1, window_bounds = array<i64: 32, 128>}, {pipeline_mode = #tpu.pipeline_mode<synchronous>, transform_indices = @transform_2, window_bounds = array<i64: 1, 128>}, {pipeline_mode = #tpu.pipeline_mode<synchronous>, transform_indices = @transform_3, window_bounds = array<i64: 128, 128>}, {pipeline_mode = #tpu.pipeline_mode<synchronous>, transform_indices = @transform_4, window_bounds = array<i64: 1, 128>}, {transform_indices = @transform_5, window_bounds = array<i64: 8, 128>}]} {
    %c0 = arith.constant 0 : index
    %c0_0 = arith.constant 0 : index
    %0 = vector.load %arg1[%c0, %c0_0] : memref<8x32xf32, #tpu.memory_space<vmem>>, vector<8x32xf32>
    %1 = arith.truncf %0 : vector<8x32xf32> to vector<8x32xbf16>
    %c0_1 = arith.constant 0 : index
    %c0_2 = arith.constant 0 : index
    %2 = vector.load %arg2[%c0_1, %c0_2] : memref<32x128xbf16, #tpu.memory_space<vmem>>, vector<32x128xbf16>
    %cst = arith.constant dense<0.000000e+00> : vector<8x128xf32>
    %3 = tpu.matmul %1, %2, %cst {dimension_numbers = #tpu.dot_dimension_numbers<[1], [0], [0], [1], [0, 0, 1, 1], [], []>} : vector<8x32xbf16>, vector<32x128xbf16>, vector<8x128xf32> -> vector<8x128xf32>
    %c0_3 = arith.constant 0 : index
    %c0_4 = arith.constant 0 : index
    %4 = vector.load %arg3[%c0_3, %c0_4] : memref<1x128xf32, #tpu.memory_space<vmem>>, vector<1x128xf32>
    %5 = vector.broadcast %4 : vector<1x128xf32> to vector<8x128xf32>
    %6 = arith.addf %3, %5 : vector<8x128xf32>
    %7 = math.tanh %6 : vector<8x128xf32>
    %8 = arith.truncf %7 : vector<8x128xf32> to vector<8x128xbf16>
    %c0_5 = arith.constant 0 : index
    %c0_6 = arith.constant 0 : index
    %9 = vector.load %arg4[%c0_5, %c0_6] : memref<128x128xbf16, #tpu.memory_space<vmem>>, vector<128x128xbf16>
    %cst_7 = arith.constant dense<0.000000e+00> : vector<8x128xf32>
    %10 = tpu.matmul %8, %9, %cst_7 {dimension_numbers = #tpu.dot_dimension_numbers<[1], [0], [0], [1], [0, 0, 1, 1], [], []>} : vector<8x128xbf16>, vector<128x128xbf16>, vector<8x128xf32> -> vector<8x128xf32>
    %c0_8 = arith.constant 0 : index
    %c0_9 = arith.constant 0 : index
    %11 = vector.load %arg5[%c0_8, %c0_9] : memref<1x128xf32, #tpu.memory_space<vmem>>, vector<1x128xf32>
    %12 = vector.broadcast %11 : vector<1x128xf32> to vector<8x128xf32>
    %13 = arith.addf %10, %12 : vector<8x128xf32>
    %c0_10 = arith.constant 0 : index
    %c0_11 = arith.constant 0 : index
    %14 = vector.load %arg6[%c0_10, %c0_11] : memref<8x128xf32, #tpu.memory_space<vmem>>, vector<8x128xf32>
    tpu.vector_store %arg6[%c0_10, %c0_11], %13 {strides = array<i32>} : memref<8x128xf32, #tpu.memory_space<vmem>>, vector<8x128xf32>,
    return
  }
  func.func @transform_0(%arg0: i32) -> (i32, i32) {
    %c0_i32 = arith.constant 0 : i32
    %c0_i32_0 = arith.constant 0 : i32
    return %arg0, %c0_i32 : i32, i32
  }
  func.func @transform_1(%arg0: i32) -> (i32, i32) {
    %c0_i32 = arith.constant 0 : i32
    %c0_i32_0 = arith.constant 0 : i32
    %c0_i32_1 = arith.constant 0 : i32
    return %c0_i32, %c0_i32_0 : i32, i32
  }
  func.func @transform_2(%arg0: i32) -> (i32, i32) {
    %c0_i32 = arith.constant 0 : i32
    %c0_i32_0 = arith.constant 0 : i32
    %c0_i32_1 = arith.constant 0 : i32
    return %c0_i32, %c0_i32_0 : i32, i32
  }
  func.func @transform_3(%arg0: i32) -> (i32, i32) {
    %c0_i32 = arith.constant 0 : i32
    %c0_i32_0 = arith.constant 0 : i32
    %c0_i32_1 = arith.constant 0 : i32
    return %c0_i32, %c0_i32_0 : i32, i32
  }
  func.func @transform_4(%arg0: i32) -> (i32, i32) {
    %c0_i32 = arith.constant 0 : i32
    %c0_i32_0 = arith.constant 0 : i32
    %c0_i32_1 = arith.constant 0 : i32
    return %c0_i32, %c0_i32_0 : i32, i32
  }
  func.func @transform_5(%arg0: i32) -> (i32, i32) {
    %c0_i32 = arith.constant 0 : i32
    %c0_i32_0 = arith.constant 0 : i32
    return %arg0, %c0_i32 : i32, i32
  }
}

module attributes {stable_mosaic.version = 11 : i64} {
  func.func @test_net_kernel(%arg0: i32, %arg1: memref<8x32xf32, #tpu.memory_space<vmem>>, %arg2: memref<32x128xbf16, #tpu.memory_space<vmem>>, %arg3: memref<1x128xf32, #tpu.memory_space<vmem>>, %arg4: memref<128x128xbf16, #tpu.memory_space<vmem>>, %arg5: memref<1x128xf32, #tpu.memory_space<vmem>>, %arg6: memref<8x128xf32, #tpu.memory_space<vmem>>) attributes {dimension_semantics = [#tpu.dimension_semantics<parallel>], iteration_bounds = array<i64: 1>, scalar_prefetch = 0 : i64, scratch_operands = 0 : i64, tpu.core_type = #tpu.core_type<tc>, window_params = [{transform_indices = @transform_0, window_bounds = array<i64: 8, 32>}, {pipeline_mode = #tpu.pipeline_mode<synchronous>, transform_indices = @transform_1, window_bounds = array<i64: 32, 128>}, {pipeline_mode = #tpu.pipeline_mode<synchronous>, transform_indices = @transform_2, window_bounds = array<i64: 1, 128>}, {pipeline_mode = #tpu.pipeline_mode<synchronous>, transform_indices = @transform_3, window_bounds = array<i64: 128, 128>}, {pipeline_mode = #tpu.pipeline_mode<synchronous>, transform_indices = @transform_4, window_bounds = array<i64: 1, 128>}, {transform_indices = @transform_5, window_bounds = array<i64: 8, 128>}]} {
    %c0 = arith.constant 0 : index
    %c0_0 = arith.constant 0 : index
    %0 = vector.load %arg1[%c0, %c0_0] : memref<8x32xf32, #tpu.memory_space<vmem>>, vector<8x32xf32>
    %1 = arith.truncf %0 : vector<8x32xf32> to vector<8x32xbf16>
    %c0_1 = arith.constant 0 : index
    %c0_2 = arith.constant 0 : index
    %2 = vector.load %arg2[%c0_1, %c0_2] : memref<32x128xbf16, #tpu.memory_space<vmem>>, vector<32x128xbf16>
    %cst = arith.constant dense<0.000000e+00> : vector<8x128xf32>
    %3 = tpu.matmul %1, %2, %cst {dimension_numbers = #tpu.dot_dimension_numbers<[1], [0], [0], [1], [0, 0, 1, 1], [], []>} : vector<8x32xbf16>, vector<32x128xbf16>, vector<8x128xf32> -> vector<8x128xf32>
    %c0_3 = arith.constant 0 : index
    %c0_4 = arith.constant 0 : index
    %4 = vector.load %arg3[%c0_3, %c0_4] : memref<1x128xf32, #tpu.memory_space<vmem>>, vector<1x128xf32>
    %5 = vector.broadcast %4 : vector<1x128xf32> to vector<8x128xf32>
    %6 = arith.addf %3, %5 : vector<8x128xf32>
    %7 = math.tanh %6 : vector<8x128xf32>
    %8 = arith.truncf %7 : vector<8x128xf32> to vector<8x128xbf16>
    %c0_5 = arith.constant 0 : index
    %c0_6 = arith.constant 0 : index
    %9 = vector.load %arg4[%c0_5, %c0_6] : memref<128x128xbf16, #tpu.memory_space<vmem>>, vector<128x128xbf16>
    %cst_7 = arith.constant dense<0.000000e+00> : vector<8x128xf32>
    %10 = tpu.matmul %8, %9, %cst_7 {dimension_numbers = #tpu.dot_dimension_numbers<[1], [0], [0], [1], [0, 0, 1, 1], [], []>} : vector<8x128xbf16>, vector<128x128xbf16>, vector<8x128xf32> -> vector<8x128xf32>
    %c0_8 = arith.constant 0 : index
    %c0_9 = arith.constant 0 : index
    %11 = vector.load %arg5[%c0_8, %c0_9] : memref<1x128xf32, #tpu.memory_space<vmem>>, vector<1x128xf32>
    %12 = vector.broadcast %11 : vector<1x128xf32> to vector<8x128xf32>
    %13 = arith.addf %10, %12 : vector<8x128xf32>
    %c0_10 = arith.constant 0 : index
    %c0_11 = arith.constant 0 : index
    %14 = vector.load %arg6[%c0_10, %c0_11] : memref<8x128xf32, #tpu.memory_space<vmem>>, vector<8x128xf32>
    tpu.vector_store %arg6[%c0_10, %c0_11], %13 {strides = array<i32>} : memref<8x128xf32, #tpu.memory_space<vmem>>, vector<8x128xf32>,
    return
  }
  func.func @transform_0(%arg0: i32) -> (i32, i32) {
    %c0_i32 = arith.constant 0 : i32
    %c0_i32_0 = arith.constant 0 : i32
    return %arg0, %c0_i32 : i32, i32
  }
  func.func @transform_1(%arg0: i32) -> (i32, i32) {
    %c0_i32 = arith.constant 0 : i32
    %c0_i32_0 = arith.constant 0 : i32
    %c0_i32_1 = arith.constant 0 : i32
    return %c0_i32, %c0_i32_0 : i32, i32
  }
  func.func @transform_2(%arg0: i32) -> (i32, i32) {
    %c0_i32 = arith.constant 0 : i32
    %c0_i32_0 = arith.constant 0 : i32
    %c0_i32_1 = arith.constant 0 : i32
    return %c0_i32, %c0_i32_0 : i32, i32
  }
  func.func @transform_3(%arg0: i32) -> (i32, i32) {
    %c0_i32 = arith.constant 0 : i32
    %c0_i32_0 = arith.constant 0 : i32
    %c0_i32_1 = arith.constant 0 : i32
    return %c0_i32, %c0_i32_0 : i32, i32
  }
  func.func @transform_4(%arg0: i32) -> (i32, i32) {
    %c0_i32 = arith.constant 0 : i32
    %c0_i32_0 = arith.constant 0 : i32
    %c0_i32_1 = arith.constant 0 : i32
    return %c0_i32, %c0_i32_0 : i32, i32
  }
  func.func @transform_5(%arg0: i32) -> (i32, i32) {
    %c0_i32 = arith.constant 0 : i32
    %c0_i32_0 = arith.constant 0 : i32
    return %arg0, %c0_i32 : i32, i32
  }
}

</mosaic_0001>

<llo_original>
// kernel: _forward.1
$region0: #{_forward.1}
  #allocation0 [shape = 'u32[]', space=smem, size = 0x4, offset = 0x4, fixed_abs, tag = 'smem constant byte address 0x4 - core index']
  #allocation1 [shape = 'u32[72,128]{1,0:T(1,128)}', space=vmem, size = 0x9000, scoped, tag = 'internal scratch']
  %s0 = inlined_call_operand.hbm [shape: f32[8,32], index: 0, kind: input, shape index: {}]
  %s1 = inlined_call_operand.hbm [shape: bf16[32,128], index: 1, kind: input, shape index: {}]
  %s2 = inlined_call_operand.vmem [shape: f32[1,128], index: 2, kind: input, shape index: {}]
  %s3 = inlined_call_operand.hbm [shape: bf16[128,128], index: 3, kind: input, shape index: {}]
  %s4 = inlined_call_operand.vmem [shape: f32[1,128], index: 4, kind: input, shape index: {}]
  %s5 = inlined_call_operand.hbm [shape: f32[8,128], index: 5, kind: output, shape index: {}]
  %s6 = sld [smem:[#allocation0]]
  $region42: #{_forward.1} parent=0
    _
  %s8 = ssub.s32 1, %s6
  %s9 = scalar_select 0, %s8, %s6
  $region1: #{_forward.1} parent=0
    #allocation2 [shape = 'u8[4096]{0}', space=vmem, size = 0x1000, scoped, tag = 'input window, operand 0, single buffered']
    #allocation3 [shape = 's32[1]{0}', space=sflag, size = 0x4, scoped, tag = 'scoped memory for _forward.1']
    #allocation4 [shape = 's32[1]{0}', space=sflag, size = 0x4, scoped, tag = 'scoped memory for _forward.1']
    #allocation5 [shape = 'u8[8192]{0}', space=vmem, size = 0x2000, scoped, tag = 'input window, operand 1, single buffered']
    #allocation6 [shape = 's32[1]{0}', space=sflag, size = 0x4, scoped, tag = 'scoped memory for _forward.1']
    #allocation7 [shape = 'u8[32768]{0}', space=vmem, size = 0x8000, scoped, tag = 'input window, operand 3, single buffered']
    #allocation8 [shape = 'u8[4096]{0}', space=vmem, size = 0x1000, scoped, tag = 'output window, operand 0, single buffered']
    %10 = vsyncpa [#allocation3], 0
    %11 = vsyncpa [#allocation6], 0
    %12 = vsyncpa [#allocation4], 0
    // Predicated region
    $region2: #{_forward.1} parent=1 // pred_check
      _
    $region3: #{_forward.1} parent=1 // pred_check_branch
      %14 = sbr.rel (0) target = $region5
    $region4: #{_forward.1} parent=1 // pred_region
      %16 = vsyncadd [#allocation3], 0
      %s18 = sshll.u32 %s0, 4
      %s19 = int_to_ptr.hbm [resolvable:$true] %s18
      %s20 = sshll.u32 [#allocation2], 4
      %s21 = int_to_ptr.vmem [resolvable:$true] %s20
      %23 = dma.hbm_to_vmem [thread:$0]  %s19, 128, %s21, [#allocation3]
    $region5: #{_forward.1} parent=1 // pred_fallthru
      _
    // Predicated region
    $region6: #{_forward.1} parent=1 // pred_check
      _
    $region7: #{_forward.1} parent=1 // pred_check_branch
      %25 = sbr.rel (0) target = $region9
    $region8: #{_forward.1} parent=1 // pred_region
      %27 = vsyncadd [#allocation6], 0
      %s28 = sshll.u32 %s1, 4
      %s29 = int_to_ptr.hbm [resolvable:$true] %s28
      %s30 = sshll.u32 [#allocation5], 4
      %s31 = int_to_ptr.vmem [resolvable:$true] %s30
      %36 = dma.hbm_to_vmem [thread:$0]  %s29, 256, %s31, [#allocation6], 64, 64, 4
    $region9: #{_forward.1} parent=1 // pred_fallthru
      _
    // Predicated region
    $region10: #{_forward.1} parent=1 // pred_check
      _
    $region11: #{_forward.1} parent=1 // pred_check_branch
      %38 = sbr.rel (0) target = $region13
    $region12: #{_forward.1} parent=1 // pred_region
      _
    $region13: #{_forward.1} parent=1 // pred_fallthru
      _
    // Predicated region
    $region14: #{_forward.1} parent=1 // pred_check
      _
    $region15: #{_forward.1} parent=1 // pred_check_branch
      %40 = sbr.rel (0) target = $region17
    $region16: #{_forward.1} parent=1 // pred_region
      %42 = vsyncadd [#allocation6], 0
      %s43 = sshll.u32 %s3, 4
      %s44 = int_to_ptr.hbm [resolvable:$true] %s43
      %s45 = sshll.u32 [#allocation7], 4
      %s46 = int_to_ptr.vmem [resolvable:$true] %s45
      %51 = dma.hbm_to_vmem [thread:$0]  %s44, 1024, %s46, [#allocation6], 64, 64, 4
    $region17: #{_forward.1} parent=1 // pred_fallthru
      _
    // Predicated region
    $region18: #{_forward.1} parent=1 // pred_check
      _
    $region19: #{_forward.1} parent=1 // pred_check_branch
      %53 = sbr.rel (0) target = $region21
    $region20: #{_forward.1} parent=1 // pred_region
      _
    $region21: #{_forward.1} parent=1 // pred_fallthru
      _
    // Predicated region
    $region22: #{_forward.1} parent=1 // pred_check
      _
    $region23: #{_forward.1} parent=1 // pred_check_branch
      %55 = sbr.rel (0) target = $region25
    $region24: #{_forward.1} parent=1 // pred_region
      %57 = dma.done [#allocation3], 128
    $region25: #{_forward.1} parent=1 // pred_fallthru
      _
    // Predicated region
    $region26: #{_forward.1} parent=1 // pred_check
      _
    $region27: #{_forward.1} parent=1 // pred_check_branch
      %59 = sbr.rel (0) target = $region29
    $region28: #{_forward.1} parent=1 // pred_region
      %61 = dma.done [#allocation6], 256
    $region29: #{_forward.1} parent=1 // pred_fallthru
      _
    // Predicated region
    $region30: #{_forward.1} parent=1 // pred_check
      _
    $region31: #{_forward.1} parent=1 // pred_check_branch
      %63 = sbr.rel (0) target = $region33
    $region32: #{_forward.1} parent=1 // pred_region
      %65 = dma.done [#allocation6], 1024
    $region33: #{_forward.1} parent=1 // pred_fallthru
      _
    %v67 = vld [vmem:[#allocation2] sm:$0xff]
    %v68 = vpack.c.bf16 %v67, %v67
    %v69 = vld [vmem:[#allocation5] sm:$0xf]
    %v70 = vld [vmem:[#allocation5 + $0x4] sm:$0xf]
    %v71 = vld [vmem:[#allocation5 + $0x8] sm:$0xf]
    %v72 = vld [vmem:[#allocation5 + $0xc] sm:$0xf]
    %v73 = vld [vmem:[%s2] sm:$0x1]
    %v75 = vperm.slane %v73, 0
    %v81 = vunpack.c.l.b16 %v69
    %v82 = vunpack.c.l.b16 %v70
    %v83 = vunpack.c.l.b16 %v71
    %v84 = vunpack.c.l.b16 %v72
    %v85 = vpack.c.b16 %v82, %v81
    %v86 = vpack.c.b16 %v84, %v83
    %vm89 = vcmask 261120
    %v91 = vsel %vm89, %v68, 0
    %93 = vmatpush.bf16.msra.mxu0 0
    %94 = vmatpush.bf16.msra.mxu0 0
    %95 = vmatpush.bf16.msra.mxu0 0
    %96 = vmatpush.bf16.msra.mxu0 0
    %97 = vmatpush.bf16.msra.mxu0 0
    %98 = vmatpush.bf16.msra.mxu0 0
    %99 = vmatpush.bf16.msra.mxu0 %v86
    %100 = vmatpush.bf16.msra.mxu0 %v85
    %101 = vmatmul.bf16.gmra.mxu0 %v91
    %v102 = vpop.f32.mrf.mxu0
    %v103 = vadd.f32 %v75, %v102
    %v104 = vpop.f32.mrf.mxu0
    %105 = vdwg.mxu0
    %v106 = vtanh.pop %v103
    %v107 = vpack.c.bf16 %v106, %v106
    %v108 = vld [vmem:[#allocation7] sm:$0xf]
    %v109 = vld [vmem:[#allocation7 + $0x4] sm:$0xf]
    %v110 = vld [vmem:[#allocation7 + $0x8] sm:$0xf]
    %v111 = vld [vmem:[#allocation7 + $0xc] sm:$0xf]
    %v112 = vld [vmem:[#allocation7 + $0x10] sm:$0xf]
    %v113 = vld [vmem:[#allocation7 + $0x14] sm:$0xf]
    %v114 = vld [vmem:[#allocation7 + $0x18] sm:$0xf]
    %v115 = vld [vmem:[#allocation7 + $0x1c] sm:$0xf]
    %v116 = vld [vmem:[#allocation7 + $0x20] sm:$0xf]
    %v117 = vld [vmem:[#allocation7 + $0x24] sm:$0xf]
    %v118 = vld [vmem:[#allocation7 + $0x28] sm:$0xf]
    %v119 = vld [vmem:[#allocation7 + $0x2c] sm:$0xf]
    %v120 = vld [vmem:[#allocation7 + $0x30] sm:$0xf]
    %v121 = vld [vmem:[#allocation7 + $0x34] sm:$0xf]
    %v122 = vld [vmem:[#allocation7 + $0x38] sm:$0xf]
    %v123 = vld [vmem:[#allocation7 + $0x3c] sm:$0xf]
    %v124 = vld [vmem:[%s4] sm:$0x1]
    %v126 = vperm.slane %v124, 0
    %v144 = vunpack.c.l.b16 %v108
    %v145 = vunpack.c.l.b16 %v109
    %v146 = vunpack.c.l.b16 %v110
    %v147 = vunpack.c.l.b16 %v111
    %v148 = vunpack.c.l.b16 %v112
    %v149 = vunpack.c.l.b16 %v113
    %v150 = vunpack.c.l.b16 %v114
    %v151 = vunpack.c.l.b16 %v115
    %v152 = vunpack.c.l.b16 %v116
    %v153 = vunpack.c.l.b16 %v117
    %v154 = vunpack.c.l.b16 %v118
    %v155 = vunpack.c.l.b16 %v119
    %v156 = vunpack.c.l.b16 %v120
    %v157 = vunpack.c.l.b16 %v121
    %v158 = vunpack.c.l.b16 %v122
    %v159 = vunpack.c.l.b16 %v123
    %v160 = vpack.c.b16 %v145, %v144
    %v161 = vpack.c.b16 %v147, %v146
    %v162 = vpack.c.b16 %v149, %v148
    %v163 = vpack.c.b16 %v151, %v150
    %v164 = vpack.c.b16 %v153, %v152
    %v165 = vpack.c.b16 %v155, %v154
    %v166 = vpack.c.b16 %v157, %v156
    %v167 = vpack.c.b16 %v159, %v158
    %176 = vmatpush.bf16.msra.mxu0 %v167
    %177 = vmatpush.bf16.msra.mxu0 %v166
    %178 = vmatpush.bf16.msra.mxu0 %v165
    %179 = vmatpush.bf16.msra.mxu0 %v164
    %180 = vmatpush.bf16.msra.mxu0 %v163
    %181 = vmatpush.bf16.msra.mxu0 %v162
    %182 = vmatpush.bf16.msra.mxu0 %v161
    %183 = vmatpush.bf16.msra.mxu0 %v160
    %184 = vmatmul.bf16.gmra.mxu0 %v107
    %v185 = vpop.f32.mrf.mxu0
    %v186 = vadd.f32 %v126, %v185
    %v187 = vpop.f32.mrf.mxu0
    %188 = vdwg.mxu0
    %189 = vst [vmem:[#allocation8] sm:$0xff] %v186
    // Predicated region
    $region34: #{_forward.1} parent=1 // pred_check
      _
    $region35: #{_forward.1} parent=1 // pred_check_branch
      %191 = sbr.rel (0) target = $region37
    $region36: #{_forward.1} parent=1 // pred_region
      %193 = vsyncadd [#allocation4], 0
      %s195 = sshll.u32 [#allocation8], 4
      %s196 = int_to_ptr.vmem [resolvable:$true] %s195
      %s197 = sshll.u32 %s5, 4
      %s198 = int_to_ptr.hbm [resolvable:$true] %s197
      %200 = dma.vmem_to_hbm [thread:$0]  %s196, 128, %s198, [#allocation4]
    $region37: #{_forward.1} parent=1 // pred_fallthru
      _
    // Predicated region
    $region38: #{_forward.1} parent=1 // pred_check
      _
    $region39: #{_forward.1} parent=1 // pred_check_branch
      %202 = sbr.rel (0) target = $region41
    $region40: #{_forward.1} parent=1 // pred_region
      %204 = dma.done [#allocation4], 128
    $region41: #{_forward.1} parent=1 // pred_fallthru
      _
    %205 = vsyncpa [#allocation3], 1
    %206 = vsyncpa [#allocation6], 1
    %207 = vsyncpa [#allocation4], 1

// kernel: _forward.1
$region0: #{_forward.1}
  #allocation0 [shape = 'u32[]', space=smem, size = 0x4, offset = 0x4, fixed_abs, tag = 'smem constant byte address 0x4 - core index']
  #allocation1 [shape = 'u32[72,128]{1,0:T(1,128)}', space=vmem, size = 0x9000, scoped, tag = 'internal scratch']
  %s0 = inlined_call_operand.hbm [shape: f32[8,32], index: 0, kind: input, shape index: {}]
  %s1 = inlined_call_operand.hbm [shape: bf16[32,128], index: 1, kind: input, shape index: {}]
  %s2 = inlined_call_operand.vmem [shape: f32[1,128], index: 2, kind: input, shape index: {}]
  %s3 = inlined_call_operand.hbm [shape: bf16[128,128], index: 3, kind: input, shape index: {}]
  %s4 = inlined_call_operand.vmem [shape: f32[1,128], index: 4, kind: input, shape index: {}]
  %s5 = inlined_call_operand.hbm [shape: f32[8,128], index: 5, kind: output, shape index: {}]
  %s6 = sld [smem:[#allocation0]]
  $region42: #{_forward.1} parent=0
    _
  %s8 = ssub.s32 1, %s6
  %s9 = scalar_select 0, %s8, %s6
  $region1: #{_forward.1} parent=0
    #allocation2 [shape = 'u8[4096]{0}', space=vmem, size = 0x1000, scoped, tag = 'input window, operand 0, single buffered']
    #allocation3 [shape = 's32[1]{0}', space=sflag, size = 0x4, scoped, tag = 'scoped memory for _forward.1']
    #allocation4 [shape = 's32[1]{0}', space=sflag, size = 0x4, scoped, tag = 'scoped memory for _forward.1']
    #allocation5 [shape = 'u8[8192]{0}', space=vmem, size = 0x2000, scoped, tag = 'input window, operand 1, single buffered']
    #allocation6 [shape = 's32[1]{0}', space=sflag, size = 0x4, scoped, tag = 'scoped memory for _forward.1']
    #allocation7 [shape = 'u8[32768]{0}', space=vmem, size = 0x8000, scoped, tag = 'input window, operand 3, single buffered']
    #allocation8 [shape = 'u8[4096]{0}', space=vmem, size = 0x1000, scoped, tag = 'output window, operand 0, single buffered']
    %10 = vsyncpa [#allocation3], 0
    %11 = vsyncpa [#allocation6], 0
    %12 = vsyncpa [#allocation4], 0
    // Predicated region
    $region2: #{_forward.1} parent=1 // pred_check
      _
    $region3: #{_forward.1} parent=1 // pred_check_branch
      %14 = sbr.rel (0) target = $region5
    $region4: #{_forward.1} parent=1 // pred_region
      %16 = vsyncadd [#allocation3], 0
      %s18 = sshll.u32 %s0, 4
      %s19 = int_to_ptr.hbm [resolvable:$true] %s18
      %s20 = sshll.u32 [#allocation2], 4
      %s21 = int_to_ptr.vmem [resolvable:$true] %s20
      %23 = dma.hbm_to_vmem [thread:$0]  %s19, 128, %s21, [#allocation3]
    $region5: #{_forward.1} parent=1 // pred_fallthru
      _
    // Predicated region
    $region6: #{_forward.1} parent=1 // pred_check
      _
    $region7: #{_forward.1} parent=1 // pred_check_branch
      %25 = sbr.rel (0) target = $region9
    $region8: #{_forward.1} parent=1 // pred_region
      %27 = vsyncadd [#allocation6], 0
      %s28 = sshll.u32 %s1, 4
      %s29 = int_to_ptr.hbm [resolvable:$true] %s28
      %s30 = sshll.u32 [#allocation5], 4
      %s31 = int_to_ptr.vmem [resolvable:$true] %s30
      %36 = dma.hbm_to_vmem [thread:$0]  %s29, 256, %s31, [#allocation6], 64, 64, 4
    $region9: #{_forward.1} parent=1 // pred_fallthru
      _
    // Predicated region
    $region10: #{_forward.1} parent=1 // pred_check
      _
    $region11: #{_forward.1} parent=1 // pred_check_branch
      %38 = sbr.rel (0) target = $region13
    $region12: #{_forward.1} parent=1 // pred_region
      _
    $region13: #{_forward.1} parent=1 // pred_fallthru
      _
    // Predicated region
    $region14: #{_forward.1} parent=1 // pred_check
      _
    $region15: #{_forward.1} parent=1 // pred_check_branch
      %40 = sbr.rel (0) target = $region17
    $region16: #{_forward.1} parent=1 // pred_region
      %42 = vsyncadd [#allocation6], 0
      %s43 = sshll.u32 %s3, 4
      %s44 = int_to_ptr.hbm [resolvable:$true] %s43
      %s45 = sshll.u32 [#allocation7], 4
      %s46 = int_to_ptr.vmem [resolvable:$true] %s45
      %51 = dma.hbm_to_vmem [thread:$0]  %s44, 1024, %s46, [#allocation6], 64, 64, 4
    $region17: #{_forward.1} parent=1 // pred_fallthru
      _
    // Predicated region
    $region18: #{_forward.1} parent=1 // pred_check
      _
    $region19: #{_forward.1} parent=1 // pred_check_branch
      %53 = sbr.rel (0) target = $region21
    $region20: #{_forward.1} parent=1 // pred_region
      _
    $region21: #{_forward.1} parent=1 // pred_fallthru
      _
    // Predicated region
    $region22: #{_forward.1} parent=1 // pred_check
      _
    $region23: #{_forward.1} parent=1 // pred_check_branch
      %55 = sbr.rel (0) target = $region25
    $region24: #{_forward.1} parent=1 // pred_region
      %57 = dma.done [#allocation3], 128
    $region25: #{_forward.1} parent=1 // pred_fallthru
      _
    // Predicated region
    $region26: #{_forward.1} parent=1 // pred_check
      _
    $region27: #{_forward.1} parent=1 // pred_check_branch
      %59 = sbr.rel (0) target = $region29
    $region28: #{_forward.1} parent=1 // pred_region
      %61 = dma.done [#allocation6], 256
    $region29: #{_forward.1} parent=1 // pred_fallthru
      _
    // Predicated region
    $region30: #{_forward.1} parent=1 // pred_check
      _
    $region31: #{_forward.1} parent=1 // pred_check_branch
      %63 = sbr.rel (0) target = $region33
    $region32: #{_forward.1} parent=1 // pred_region
      %65 = dma.done [#allocation6], 1024
    $region33: #{_forward.1} parent=1 // pred_fallthru
      _
    %v67 = vld [vmem:[#allocation2] sm:$0xff]
    %v68 = vpack.c.bf16 %v67, %v67
    %v69 = vld [vmem:[#allocation5] sm:$0xf]
    %v70 = vld [vmem:[#allocation5 + $0x4] sm:$0xf]
    %v71 = vld [vmem:[#allocation5 + $0x8] sm:$0xf]
    %v72 = vld [vmem:[#allocation5 + $0xc] sm:$0xf]
    %v73 = vld [vmem:[%s2] sm:$0x1]
    %v75 = vperm.slane %v73, 0
    %v81 = vunpack.c.l.b16 %v69
    %v82 = vunpack.c.l.b16 %v70
    %v83 = vunpack.c.l.b16 %v71
    %v84 = vunpack.c.l.b16 %v72
    %v85 = vpack.c.b16 %v82, %v81
    %v86 = vpack.c.b16 %v84, %v83
    %vm89 = vcmask 261120
    %v91 = vsel %vm89, %v68, 0
    %93 = vmatpush.bf16.msra.mxu0 0
    %94 = vmatpush.bf16.msra.mxu0 0
    %95 = vmatpush.bf16.msra.mxu0 0
    %96 = vmatpush.bf16.msra.mxu0 0
    %97 = vmatpush.bf16.msra.mxu0 0
    %98 = vmatpush.bf16.msra.mxu0 0
    %99 = vmatpush.bf16.msra.mxu0 %v86
    %100 = vmatpush.bf16.msra.mxu0 %v85
    %101 = vmatmul.bf16.gmra.mxu0 %v91
    %v102 = vpop.f32.mrf.mxu0
    %v103 = vadd.f32 %v75, %v102
    %v104 = vpop.f32.mrf.mxu0
    %105 = vdwg.mxu0
    %v106 = vtanh.pop %v103
    %v107 = vpack.c.bf16 %v106, %v106
    %v108 = vld [vmem:[#allocation7] sm:$0xf]
    %v109 = vld [vmem:[#allocation7 + $0x4] sm:$0xf]
    %v110 = vld [vmem:[#allocation7 + $0x8] sm:$0xf]
    %v111 = vld [vmem:[#allocation7 + $0xc] sm:$0xf]
    %v112 = vld [vmem:[#allocation7 + $0x10] sm:$0xf]
    %v113 = vld [vmem:[#allocation7 + $0x14] sm:$0xf]
    %v114 = vld [vmem:[#allocation7 + $0x18] sm:$0xf]
    %v115 = vld [vmem:[#allocation7 + $0x1c] sm:$0xf]
    %v116 = vld [vmem:[#allocation7 + $0x20] sm:$0xf]
    %v117 = vld [vmem:[#allocation7 + $0x24] sm:$0xf]
    %v118 = vld [vmem:[#allocation7 + $0x28] sm:$0xf]
    %v119 = vld [vmem:[#allocation7 + $0x2c] sm:$0xf]
    %v120 = vld [vmem:[#allocation7 + $0x30] sm:$0xf]
    %v121 = vld [vmem:[#allocation7 + $0x34] sm:$0xf]
    %v122 = vld [vmem:[#allocation7 + $0x38] sm:$0xf]
    %v123 = vld [vmem:[#allocation7 + $0x3c] sm:$0xf]
    %v124 = vld [vmem:[%s4] sm:$0x1]
    %v126 = vperm.slane %v124, 0
    %v144 = vunpack.c.l.b16 %v108
    %v145 = vunpack.c.l.b16 %v109
    %v146 = vunpack.c.l.b16 %v110
    %v147 = vunpack.c.l.b16 %v111
    %v148 = vunpack.c.l.b16 %v112
    %v149 = vunpack.c.l.b16 %v113
    %v150 = vunpack.c.l.b16 %v114
    %v151 = vunpack.c.l.b16 %v115
    %v152 = vunpack.c.l.b16 %v116
    %v153 = vunpack.c.l.b16 %v117
    %v154 = vunpack.c.l.b16 %v118
    %v155 = vunpack.c.l.b16 %v119
    %v156 = vunpack.c.l.b16 %v120
    %v157 = vunpack.c.l.b16 %v121
    %v158 = vunpack.c.l.b16 %v122
    %v159 = vunpack.c.l.b16 %v123
    %v160 = vpack.c.b16 %v145, %v144
    %v161 = vpack.c.b16 %v147, %v146
    %v162 = vpack.c.b16 %v149, %v148
    %v163 = vpack.c.b16 %v151, %v150
    %v164 = vpack.c.b16 %v153, %v152
    %v165 = vpack.c.b16 %v155, %v154
    %v166 = vpack.c.b16 %v157, %v156
    %v167 = vpack.c.b16 %v159, %v158
    %176 = vmatpush.bf16.msra.mxu0 %v167
    %177 = vmatpush.bf16.msra.mxu0 %v166
    %178 = vmatpush.bf16.msra.mxu0 %v165
    %179 = vmatpush.bf16.msra.mxu0 %v164
    %180 = vmatpush.bf16.msra.mxu0 %v163
    %181 = vmatpush.bf16.msra.mxu0 %v162
    %182 = vmatpush.bf16.msra.mxu0 %v161
    %183 = vmatpush.bf16.msra.mxu0 %v160
    %184 = vmatmul.bf16.gmra.mxu0 %v107
    %v185 = vpop.f32.mrf.mxu0
    %v186 = vadd.f32 %v126, %v185
    %v187 = vpop.f32.mrf.mxu0
    %188 = vdwg.mxu0
    %189 = vst [vmem:[#allocation8] sm:$0xff] %v186
    // Predicated region
    $region34: #{_forward.1} parent=1 // pred_check
      _
    $region35: #{_forward.1} parent=1 // pred_check_branch
      %191 = sbr.rel (0) target = $region37
    $region36: #{_forward.1} parent=1 // pred_region
      %193 = vsyncadd [#allocation4], 0
      %s195 = sshll.u32 [#allocation8], 4
      %s196 = int_to_ptr.vmem [resolvable:$true] %s195
      %s197 = sshll.u32 %s5, 4
      %s198 = int_to_ptr.hbm [resolvable:$true] %s197
      %200 = dma.vmem_to_hbm [thread:$0]  %s196, 128, %s198, [#allocation4]
    $region37: #{_forward.1} parent=1 // pred_fallthru
      _
    // Predicated region
    $region38: #{_forward.1} parent=1 // pred_check
      _
    $region39: #{_forward.1} parent=1 // pred_check_branch
      %202 = sbr.rel (0) target = $region41
    $region40: #{_forward.1} parent=1 // pred_region
      %204 = dma.done [#allocation4], 128
    $region41: #{_forward.1} parent=1 // pred_fallthru
      _
    %205 = vsyncpa [#allocation3], 1
    %206 = vsyncpa [#allocation6], 1
    %207 = vsyncpa [#allocation4], 1

</llo_original>
